<compile_context>
chip_gen: v6e
topology: v6e:2x2x1
jax: 0.10.0
libtpu: 0.0.40
codegen_flags: <defaults>
</compile_context>

<pallas_src>
import jax
import jax.numpy as jnp
from jax.experimental import pallas as pl
from jax.experimental.pallas import tpu as pltpu


_LANE = 128
_SUBLANE = 8
_INV_SQRT2 = 0.7071067811865475


def _round_up(v, m):
    return (v + m - 1) // m * m


def _cdiv(a, b):
    return (a + b - 1) // b


# ------------------------------ VMEM planning --------------------------------

def _vmem_budget_and_limit():
    """Generation-aware scoped-VMEM limit and planning budget (bytes)."""
    try:
        cap = int(pltpu.get_tpu_info().vmem_capacity_bytes)
    except Exception:
        cap = 64 * 1024 * 1024  # conservative fallback (v7x per-core VMEM)
    # ~75% of physical VMEM: ~96 MiB on v5e/v6e (128 MiB), ~48 MiB on v7x (64).
    limit = min(cap * 3 // 4, 112 * 1024 * 1024)
    budget = limit - 4 * 1024 * 1024  # headroom for compiler scratch/temps
    return budget, limit


def _weight_bytes(kp, th, w_isz, n_buf):
    # W1 (kp,th) + b1 (1,th) + W2 (th,kp), n_buf pipeline buffers each, plus
    # the always-resident single-buffered b2 (1,kp).
    return n_buf * (2 * kp * th + th) * w_isz + kp * w_isz


def _plan_hidden_tile(kp, hp, w_isz, budget):
    """Pick the hidden-dim tile th.  Returns th (th == hp => fully resident)."""
    w_budget = int(budget * 0.6)  # leave >=40% of the budget for row tiles
    if _weight_bytes(kp, hp, w_isz, 1) <= w_budget:
        return hp  # weights fully resident, single-buffered (grid-invariant)
    # Stream W1/W2 along the hidden dim (double-buffered tiles).
    n_h = 2
    th = _round_up(_cdiv(hp, n_h), 256)
    while th > 256 and _weight_bytes(kp, th, w_isz, 2) > w_budget:
        n_h += 1
        th = _round_up(_cdiv(hp, n_h), 256)
    # TODO(synk): also tile the kp (n_embd) dim if even th=256 does not fit.
    return th


def _pick_row_tile(m, kp, th, in_isz, out_isz, avail):
    """Largest row tile whose live VMEM fits in `avail` bytes."""
    # Per-row live bytes: x (2 pipeline bufs) + out (2 bufs) + f32 accumulator
    # + f32 hidden activation + one f32 matmul-result temp.
    per_row = 2 * kp * in_isz + 2 * kp * out_isz + 4 * kp + 4 * th + 4 * kp
    tm = 1024
    while tm > _SUBLANE and tm * per_row > avail:
        tm //= 2
    tm = max(tm, _SUBLANE)
    tm = min(tm, _round_up(m, _SUBLANE))           # don't exceed the data
    # Give v7x's two TensorCores >=2 row steps when there is enough work
    # (no-op below 512 rows; negligible cost on the 1-TC chips).
    tm = min(tm, max(256, _round_up(_cdiv(m, 2), 256)))
    return max(tm, _SUBLANE)


# ------------------------------- Pallas kernel -------------------------------

def _fused_mlp_kernel(x_ref, w1_ref, b1_ref, w2_ref, b2_ref, o_ref, acc_ref):
    hi = pl.program_id(1)  # hidden-dim (reduction) axis

    @pl.when(hi == 0)
    def _():
        acc_ref[...] = jnp.zeros_like(acc_ref)

    h = jnp.dot(x_ref[...], w1_ref[...],
                preferred_element_type=jnp.float32) + b1_ref[...]
    # Exact (erf-based) GELU, bit-matching torch.nn.GELU().
    # TODO(synk): switch to tanh-approx GELU (EUP slot) if numerics allow.
    h = 0.5 * h * (1.0 + jax.lax.erf(h * _INV_SQRT2))
    acc_ref[...] += jnp.dot(h.astype(w2_ref.dtype), w2_ref[...],
                            preferred_element_type=jnp.float32)

    @pl.when(hi == pl.num_programs(1) - 1)
    def _():
        o_ref[...] = (acc_ref[...] + b2_ref[...]).astype(o_ref.dtype)


# --------------------------------- wrapper ------------------------------------

class PallasMLP:
    """y = Linear2(GELU(Linear1(x))) as one fused Pallas TPU kernel.

    Weight padding to lane-dense (128-multiple) shapes happens ONCE here, not
    per forward call.  Zero padding is exact: zero W1 columns -> h = 0,
    GELU(0) = 0, and zero W2 rows / zero x-pad columns contribute nothing.
    """

    def __init__(self, w1, b1, w2, b2):
        k, h = w1.shape
        assert w2.shape == (h, k) and b1.shape == (h,) and b2.shape == (k,)
        self.n_embd = k
        self.kp = _round_up(k, _LANE)
        hp = _round_up(h, _LANE)

        self.vmem_budget, self.vmem_limit = _vmem_budget_and_limit()
        w_isz = jnp.dtype(w1.dtype).itemsize
        self.th = _plan_hidden_tile(self.kp, hp, w_isz, self.vmem_budget)
        self.hp = _round_up(hp, self.th)       # so th divides the hidden dim
        self.n_h = self.hp // self.th
        self.w_plan_bytes = _weight_bytes(
            self.kp, self.th, w_isz, 1 if self.n_h == 1 else 2)

        self.w1p = jnp.pad(w1, ((0, self.kp - k), (0, self.hp - h)))
        self.b1p = jnp.pad(b1, (0, self.hp - h)).reshape(1, self.hp)
        self.w2p = jnp.pad(w2, ((0, self.hp - h), (0, self.kp - k)))
        self.b2p = jnp.pad(b2, (0, self.kp - k)).reshape(1, self.kp)

    def __call__(self, x):
        orig_shape = x.shape
        k = orig_shape[-1]
        assert k == self.n_embd
        m = 1
        for d in orig_shape[:-1]:
            m *= d
        x2 = x.reshape(m, k)
        if self.kp != k:  # lane-dense channel padding only (no row padding)
            x2 = jnp.pad(x2, ((0, 0), (0, self.kp - k)))

        kp, th, n_h = self.kp, self.th, self.n_h
        in_isz = jnp.dtype(x.dtype).itemsize
        tm = _pick_row_tile(m, kp, th, in_isz, in_isz,
                            self.vmem_budget - self.w_plan_bytes)
        n_rows = _cdiv(m, tm)   # ragged last row block is masked by Pallas

        # Grid-invariant operands get a single pipeline buffer.
        w_kwargs = dict(pipeline_mode=pl.Buffered(1)) if n_h == 1 else {}

        out = pl.pallas_call(
            _fused_mlp_kernel,
            out_shape=jax.ShapeDtypeStruct((m, kp), x.dtype),
            grid=(n_rows, n_h),
            in_specs=[
                pl.BlockSpec((tm, kp), lambda i, j: (i, 0)),              # x
                pl.BlockSpec((kp, th), lambda i, j: (0, j), **w_kwargs),  # W1
                pl.BlockSpec((1, th), lambda i, j: (0, j), **w_kwargs),   # b1
                pl.BlockSpec((th, kp), lambda i, j: (j, 0), **w_kwargs),  # W2
                pl.BlockSpec((1, kp), lambda i, j: (0, 0),
                             pipeline_mode=pl.Buffered(1)),               # b2
            ],
            out_specs=pl.BlockSpec((tm, kp), lambda i, j: (i, 0)),
            scratch_shapes=[pltpu.VMEM((tm, kp), jnp.float32)],
            compiler_params=pltpu.CompilerParams(
                dimension_semantics=("parallel", "arbitrary"),
                vmem_limit_bytes=self.vmem_limit),
        )(x2, self.w1p, self.b1p, self.w2p, self.b2p)

        if kp != k:
            out = out[:, :k]
        return out.reshape(orig_shape)


# ---------------------------------- main ---------------------------------------

if __name__ == "__main__":
    key = jax.random.PRNGKey(0)
    kx, kw1, kb1, kw2, kb2 = jax.random.split(key, 5)

    batch, seq, n_embd = 2, 64, 32
    hidden_dim = 4 * n_embd  # the 4x expansion the Swin MLP uses

    x = jax.random.normal(kx, (batch, seq, n_embd), jnp.float32)
    w1 = 0.02 * jax.random.normal(kw1, (n_embd, hidden_dim), jnp.float32)
    b1 = 0.01 * jax.random.normal(kb1, (hidden_dim,), jnp.float32)
    w2 = 0.02 * jax.random.normal(kw2, (hidden_dim, n_embd), jnp.float32)
    b2 = 0.01 * jax.random.normal(kb2, (n_embd,), jnp.float32)

    mlp = PallasMLP(w1, b1, w2, b2)      # weights padded once, not per call
    fwd = jax.jit(mlp.__call__)
    out = jax.block_until_ready(fwd(x))

    # Pure-JAX reference (exact GELU, matching torch.nn.GELU()).
    ref = jnp.dot(jax.nn.gelu(jnp.dot(x, w1) + b1, approximate=False), w2) + b2

    assert out.shape == x.shape, out.shape
    assert bool(jnp.all(jnp.isfinite(out)))
    assert bool(jnp.allclose(out, ref, atol=1e-5, rtol=1e-5))
    print("KERNEL_OK")
</pallas_src>

<mosaic_0001>
module attributes {stable_mosaic.version = 11 : i64} {
  func.func @_fused_mlp_kernel(%arg0: i32, %arg1: i32, %arg2: memref<128x128xf32, #tpu.memory_space<vmem>>, %arg3: memref<128x128xf32, #tpu.memory_space<vmem>>, %arg4: memref<1x128xf32, #tpu.memory_space<vmem>>, %arg5: memref<128x128xf32, #tpu.memory_space<vmem>>, %arg6: memref<1x128xf32, #tpu.memory_space<vmem>>, %arg7: memref<128x128xf32, #tpu.memory_space<vmem>>, %arg8: memref<128x128xf32, #tpu.memory_space<vmem>>) attributes {dimension_semantics = [#tpu.dimension_semantics<parallel>, #tpu.dimension_semantics<arbitrary>], iteration_bounds = array<i64: 1, 1>, scalar_prefetch = 0 : i64, scratch_operands = 1 : i64, tpu.core_type = #tpu.core_type<tc>, window_params = [{transform_indices = @transform_0, window_bounds = array<i64: 128, 128>}, {pipeline_mode = #tpu.pipeline_mode<synchronous>, transform_indices = @transform_1, window_bounds = array<i64: 128, 128>}, {pipeline_mode = #tpu.pipeline_mode<synchronous>, transform_indices = @transform_2, window_bounds = array<i64: 1, 128>}, {pipeline_mode = #tpu.pipeline_mode<synchronous>, transform_indices = @transform_3, window_bounds = array<i64: 128, 128>}, {pipeline_mode = #tpu.pipeline_mode<synchronous>, transform_indices = @transform_4, window_bounds = array<i64: 1, 128>}, {transform_indices = @transform_5, window_bounds = array<i64: 128, 128>}]} {
    %c0_i32 = arith.constant 0 : i32
    %0 = arith.cmpi eq, %arg1, %c0_i32 : i32
    %1 = arith.extui %0 : i1 to i32
    %c0_i32_0 = arith.constant 0 : i32
    %2 = arith.cmpi ne, %1, %c0_i32_0 : i32
    scf.if %2 {
      %cst_18 = arith.constant 0.000000e+00 : f32
      %25 = vector.broadcast %cst_18 : f32 to vector<128x128xf32>
      %c0_19 = arith.constant 0 : index
      %c0_20 = arith.constant 0 : index
      %26 = vector.load %arg8[%c0_19, %c0_20] : memref<128x128xf32, #tpu.memory_space<vmem>>, vector<128x128xf32>
      tpu.vector_store %arg8[%c0_19, %c0_20], %25 {strides = array<i32>} : memref<128x128xf32, #tpu.memory_space<vmem>>, vector<128x128xf32>,
    } else {
    }
    %c0 = arith.constant 0 : index
    %c0_1 = arith.constant 0 : index
    %3 = vector.load %arg2[%c0, %c0_1] : memref<128x128xf32, #tpu.memory_space<vmem>>, vector<128x128xf32>
    %c0_2 = arith.constant 0 : index
    %c0_3 = arith.constant 0 : index
    %4 = vector.load %arg3[%c0_2, %c0_3] : memref<128x128xf32, #tpu.memory_space<vmem>>, vector<128x128xf32>
    %cst = arith.constant dense<0.000000e+00> : vector<128x128xf32>
    %5 = tpu.matmul %3, %4, %cst {dimension_numbers = #tpu.dot_dimension_numbers<[1], [0], [0], [1], [0, 0, 1, 1], [], []>} : vector<128x128xf32>, vector<128x128xf32>, vector<128x128xf32> -> vector<128x128xf32>
    %c0_4 = arith.constant 0 : index
    %c0_5 = arith.constant 0 : index
    %6 = vector.load %arg4[%c0_4, %c0_5] : memref<1x128xf32, #tpu.memory_space<vmem>>, vector<1x128xf32>
    %7 = vector.broadcast %6 : vector<1x128xf32> to vector<128x128xf32>
    %8 = arith.addf %5, %7 : vector<128x128xf32>
    %cst_6 = arith.constant 5.000000e-01 : f32
    %9 = vector.broadcast %cst_6 : f32 to vector<128x128xf32>
    %10 = arith.mulf %9, %8 : vector<128x128xf32>
    %cst_7 = arith.constant 0.707106769 : f32
    %11 = vector.broadcast %cst_7 : f32 to vector<128x128xf32>
    %12 = arith.mulf %8, %11 : vector<128x128xf32>
    %13 = math.erf %12 : vector<128x128xf32>
    %cst_8 = arith.constant 1.000000e+00 : f32
    %14 = vector.broadcast %cst_8 : f32 to vector<128x128xf32>
    %15 = arith.addf %14, %13 : vector<128x128xf32>
    %16 = arith.mulf %10, %15 : vector<128x128xf32>
    %c0_9 = arith.constant 0 : index
    %c0_10 = arith.constant 0 : index
    %17 = vector.load %arg8[%c0_9, %c0_10] : memref<128x128xf32, #tpu.memory_space<vmem>>, vector<128x128xf32>
    %c0_11 = arith.constant 0 : index
    %c0_12 = arith.constant 0 : index
    %18 = vector.load %arg5[%c0_11, %c0_12] : memref<128x128xf32, #tpu.memory_space<vmem>>, vector<128x128xf32>
    %cst_13 = arith.constant dense<0.000000e+00> : vector<128x128xf32>
    %19 = tpu.matmul %16, %18, %cst_13 {dimension_numbers = #tpu.dot_dimension_numbers<[1], [0], [0], [1], [0, 0, 1, 1], [], []>} : vector<128x128xf32>, vector<128x128xf32>, vector<128x128xf32> -> vector<128x128xf32>
    %20 = arith.addf %17, %19 : vector<128x128xf32>
    %c0_14 = arith.constant 0 : index
    %c0_15 = arith.constant 0 : index
    %21 = vector.load %arg8[%c0_14, %c0_15] : memref<128x128xf32, #tpu.memory_space<vmem>>, vector<128x128xf32>
    tpu.vector_store %arg8[%c0_14, %c0_15], %20 {strides = array<i32>} : memref<128x128xf32, #tpu.memory_space<vmem>>, vector<128x128xf32>,
    %c0_i32_16 = arith.constant 0 : i32
    %22 = arith.cmpi eq, %arg1, %c0_i32_16 : i32
    %23 = arith.extui %22 : i1 to i32
    %c0_i32_17 = arith.constant 0 : i32
    %24 = arith.cmpi ne, %23, %c0_i32_17 : i32
    scf.if %24 {
      %c0_18 = arith.constant 0 : index
      %c0_19 = arith.constant 0 : index
      %25 = vector.load %arg8[%c0_18, %c0_19] : memref<128x128xf32, #tpu.memory_space<vmem>>, vector<128x128xf32>
      %c0_20 = arith.constant 0 : index
      %c0_21 = arith.constant 0 : index
      %26 = vector.load %arg6[%c0_20, %c0_21] : memref<1x128xf32, #tpu.memory_space<vmem>>, vector<1x128xf32>
      %27 = vector.broadcast %26 : vector<1x128xf32> to vector<128x128xf32>
      %28 = arith.addf %25, %27 : vector<128x128xf32>
      %c0_22 = arith.constant 0 : index
      %c0_23 = arith.constant 0 : index
      %29 = vector.load %arg7[%c0_22, %c0_23] : memref<128x128xf32, #tpu.memory_space<vmem>>, vector<128x128xf32>
      tpu.vector_store %arg7[%c0_22, %c0_23], %28 {strides = array<i32>} : memref<128x128xf32, #tpu.memory_space<vmem>>, vector<128x128xf32>,
    } else {
    }
    return
  }
  func.func @transform_0(%arg0: i32, %arg1: i32) -> (i32, i32) {
    %c0_i32 = arith.constant 0 : i32
    %c0_i32_0 = arith.constant 0 : i32
    return %arg0, %c0_i32 : i32, i32
  }
  func.func @transform_1(%arg0: i32, %arg1: i32) -> (i32, i32) {
    %c0_i32 = arith.constant 0 : i32
    %c0_i32_0 = arith.constant 0 : i32
    return %c0_i32, %arg1 : i32, i32
  }
  func.func @transform_2(%arg0: i32, %arg1: i32) -> (i32, i32) {
    %c0_i32 = arith.constant 0 : i32
    %c0_i32_0 = arith.constant 0 : i32
    return %c0_i32, %arg1 : i32, i32
  }
  func.func @transform_3(%arg0: i32, %arg1: i32) -> (i32, i32) {
    %c0_i32 = arith.constant 0 : i32
    %c0_i32_0 = arith.constant 0 : i32
    return %arg1, %c0_i32 : i32, i32
  }
  func.func @transform_4(%arg0: i32, %arg1: i32) -> (i32, i32) {
    %c0_i32 = arith.constant 0 : i32
    %c0_i32_0 = arith.constant 0 : i32
    %c0_i32_1 = arith.constant 0 : i32
    return %c0_i32, %c0_i32_0 : i32, i32
  }
  func.func @transform_5(%arg0: i32, %arg1: i32) -> (i32, i32) {
    %c0_i32 = arith.constant 0 : i32
    %c0_i32_0 = arith.constant 0 : i32
    return %arg0, %c0_i32 : i32, i32
  }
}

</mosaic_0001>

<llo_original>
// kernel: a_call__.1
$region0: #{a_call__.1}
  #allocation0 [shape = 'u32[]', space=smem, size = 0x4, offset = 0x4, fixed_abs, tag = 'smem constant byte address 0x4 - core index']
  #allocation1 [shape = 'u32[144,128]{1,0:T(1,128)}', space=vmem, size = 0x12000, scoped, tag = 'internal scratch']
  #allocation2 [shape = 'f32[128,128]{1,0:T(8,128)}', space=vmem, size = 0x10000, scoped, tag = 'scratch operand']
  %s0 = inlined_call_operand.vmem [shape: f32[128,128], index: 0, kind: input, shape index: {}]
  %s1 = inlined_call_operand.vmem [shape: f32[128,128], index: 1, kind: input, shape index: {}]
  %s2 = inlined_call_operand.vmem [shape: f32[1,128], index: 2, kind: input, shape index: {}]
  %s3 = inlined_call_operand.vmem [shape: f32[128,128], index: 3, kind: input, shape index: {}]
  %s4 = inlined_call_operand.vmem [shape: f32[1,128], index: 4, kind: input, shape index: {}]
  %s5 = inlined_call_operand.vmem [shape: f32[128,128], index: 5, kind: output, shape index: {}]
  %s6 = sld [smem:[#allocation0]]
  $region38: #{a_call__.1} parent=0
    _
  %s8 = ssub.s32 1, %s6
  %s9 = scalar_select 0, %s8, %s6
  // Predicated region
  $region2: #{a_call__.1} parent=0 // pred_check
    _
  $region3: #{a_call__.1} parent=0 // pred_check_branch
    %11 = sbr.rel (0) target = $region5
  $region4: #{a_call__.1} parent=0 // pred_region
    _
  $region5: #{a_call__.1} parent=0 // pred_fallthru
    _
  // Predicated region
  $region6: #{a_call__.1} parent=0 // pred_check
    _
  $region7: #{a_call__.1} parent=0 // pred_check_branch
    %13 = sbr.rel (0) target = $region9
  $region8: #{a_call__.1} parent=0 // pred_region
    _
  $region9: #{a_call__.1} parent=0 // pred_fallthru
    _
  // Predicated region
  $region10: #{a_call__.1} parent=0 // pred_check
    _
  $region11: #{a_call__.1} parent=0 // pred_check_branch
    %15 = sbr.rel (0) target = $region13
  $region12: #{a_call__.1} parent=0 // pred_region
    _
  $region13: #{a_call__.1} parent=0 // pred_fallthru
    _
  // Predicated region
  $region14: #{a_call__.1} parent=0 // pred_check
    _
  $region15: #{a_call__.1} parent=0 // pred_check_branch
    %17 = sbr.rel (0) target = $region17
  $region16: #{a_call__.1} parent=0 // pred_region
    _
  $region17: #{a_call__.1} parent=0 // pred_fallthru
    _
  // Predicated region
  $region18: #{a_call__.1} parent=0 // pred_check
    _
  $region19: #{a_call__.1} parent=0 // pred_check_branch
    %19 = sbr.rel (0) target = $region21
  $region20: #{a_call__.1} parent=0 // pred_region
    _
  $region21: #{a_call__.1} parent=0 // pred_fallthru
    _
  %p20 = scmp.eq.s32.totalorder 0, 0
  // Predicated region
  $region22: #{a_call__.1} parent=0 // pred_check
    %p21 = pneg %p20
  $region23: #{a_call__.1} parent=0 // pred_check_branch
    %23 = sbr.rel (%p21) target = $region25
  $region24: #{a_call__.1} parent=0 // pred_region
    %24 = vst [vmem:[#allocation2] sm:$0xff] 0.0
    %25 = vst [vmem:[#allocation2 + $0x8] sm:$0xff] 0.0
    %26 = vst [vmem:[#allocation2 + $0x10] sm:$0xff] 0.0
    %27 = vst [vmem:[#allocation2 + $0x18] sm:$0xff] 0.0
    %28 = vst [vmem:[#allocation2 + $0x20] sm:$0xff] 0.0
    %29 = vst [vmem:[#allocation2 + $0x28] sm:$0xff] 0.0
    %30 = vst [vmem:[#allocation2 + $0x30] sm:$0xff] 0.0
    %31 = vst [vmem:[#allocation2 + $0x38] sm:$0xff] 0.0
    %32 = vst [vmem:[#allocation2 + $0x40] sm:$0xff] 0.0
    %33 = vst [vmem:[#allocation2 + $0x48] sm:$0xff] 0.0
    %34 = vst [vmem:[#allocation2 + $0x50] sm:$0xff] 0.0
    %35 = vst [vmem:[#allocation2 + $0x58] sm:$0xff] 0.0
    %36 = vst [vmem:[#allocation2 + $0x60] sm:$0xff] 0.0
    %37 = vst [vmem:[#allocation2 + $0x68] sm:$0xff] 0.0
    %38 = vst [vmem:[#allocation2 + $0x70] sm:$0xff] 0.0
    %39 = vst [vmem:[#allocation2 + $0x78] sm:$0xff] 0.0
  $region25: #{a_call__.1} parent=0 // pred_fallthru
    _
  %v40 = vld [vmem:[%s0] sm:$0xff]
  %v41 = vld [vmem:[%s0 + $0x8] sm:$0xff]
  %v42 = vld [vmem:[%s0 + $0x10] sm:$0xff]
  %v43 = vld [vmem:[%s0 + $0x18] sm:$0xff]
  %v44 = vld [vmem:[%s0 + $0x20] sm:$0xff]
  %v45 = vld [vmem:[%s0 + $0x28] sm:$0xff]
  %v46 = vld [vmem:[%s0 + $0x30] sm:$0xff]
  %v47 = vld [vmem:[%s0 + $0x38] sm:$0xff]
  %v48 = vld [vmem:[%s0 + $0x40] sm:$0xff]
  %v49 = vld [vmem:[%s0 + $0x48] sm:$0xff]
  %v50 = vld [vmem:[%s0 + $0x50] sm:$0xff]
  %v51 = vld [vmem:[%s0 + $0x58] sm:$0xff]
  %v52 = vld [vmem:[%s0 + $0x60] sm:$0xff]
  %v53 = vld [vmem:[%s0 + $0x68] sm:$0xff]
  %v54 = vld [vmem:[%s0 + $0x70] sm:$0xff]
  %v55 = vld [vmem:[%s0 + $0x78] sm:$0xff]
  %v56 = vld [vmem:[%s1] sm:$0xff]
  %v57 = vld [vmem:[%s1 + $0x8] sm:$0xff]
  %v58 = vld [vmem:[%s1 + $0x10] sm:$0xff]
  %v59 = vld [vmem:[%s1 + $0x18] sm:$0xff]
  %v60 = vld [vmem:[%s1 + $0x20] sm:$0xff]
  %v61 = vld [vmem:[%s1 + $0x28] sm:$0xff]
  %v62 = vld [vmem:[%s1 + $0x30] sm:$0xff]
  %v63 = vld [vmem:[%s1 + $0x38] sm:$0xff]
  %v64 = vld [vmem:[%s1 + $0x40] sm:$0xff]
  %v65 = vld [vmem:[%s1 + $0x48] sm:$0xff]
  %v66 = vld [vmem:[%s1 + $0x50] sm:$0xff]
  %v67 = vld [vmem:[%s1 + $0x58] sm:$0xff]
  %v68 = vld [vmem:[%s1 + $0x60] sm:$0xff]
  %v69 = vld [vmem:[%s1 + $0x68] sm:$0xff]
  %v70 = vld [vmem:[%s1 + $0x70] sm:$0xff]
  %v71 = vld [vmem:[%s1 + $0x78] sm:$0xff]
  %v72 = vld [vmem:[%s2] sm:$0x1]
  %v74 = vlaneseq
  %v75 = vshrl.u32 %v74, 7
  %v76 = vsub.s32 0, %v75
  %v77 = vrot.slane %v72, %v76
  %79 = vmatprep.subr.mxu0 0.0
  %80 = vmatpush1.msra.mxu0 %v71
  %81 = vmatprep.subr.mxu0 0.0
  %82 = vmatpush1.msra.mxu0 %v70
  %83 = vmatprep.subr.mxu0 0.0
  %84 = vmatpush1.msra.mxu0 %v69
  %85 = vmatprep.subr.mxu0 0.0
  %86 = vmatpush1.msra.mxu0 %v68
  %87 = vmatprep.subr.mxu0 0.0
  %88 = vmatpush1.msra.mxu0 %v67
  %89 = vmatprep.subr.mxu0 0.0
  %90 = vmatpush1.msra.mxu0 %v66
  %91 = vmatprep.subr.mxu0 0.0
  %92 = vmatpush1.msra.mxu0 %v65
  %93 = vmatprep.subr.mxu0 0.0
  %94 = vmatpush1.msra.mxu0 %v64
  %95 = vmatprep.subr.mxu0 0.0
  %96 = vmatpush1.msra.mxu0 %v63
  %97 = vmatprep.subr.mxu0 0.0
  %98 = vmatpush1.msra.mxu0 %v62
  %99 = vmatprep.subr.mxu0 0.0
  %100 = vmatpush1.msra.mxu0 %v61
  %101 = vmatprep.subr.mxu0 0.0
  %102 = vmatpush1.msra.mxu0 %v60
  %103 = vmatprep.subr.mxu0 0.0
  %104 = vmatpush1.msra.mxu0 %v59
  %105 = vmatprep.subr.mxu0 0.0
  %106 = vmatpush1.msra.mxu0 %v58
  %107 = vmatprep.subr.mxu0 0.0
  %108 = vmatpush1.msra.mxu0 %v57
  %109 = vmatprep.subr.mxu0 0.0
  %110 = vmatpush1.msra.mxu0 %v56
  %111 = vmatprep.subr.mxu0 0.0
  %112 = vmatpush2.msra.mxu0 0.0
  %113 = vmatprep.subr.mxu0 0.0
  %114 = vmatpush2.msra.mxu0 0.0
  %115 = vmatprep.subr.mxu0 0.0
  %116 = vmatpush2.msra.mxu0 0.0
  %117 = vmatprep.subr.mxu0 0.0
  %118 = vmatpush2.msra.mxu0 0.0
  %119 = vmatprep.subr.mxu0 0.0
  %120 = vmatpush2.msra.mxu0 0.0
  %121 = vmatprep.subr.mxu0 0.0
  %122 = vmatpush2.msra.mxu0 0.0
  %123 = vmatprep.subr.mxu0 0.0
  %124 = vmatpush2.msra.mxu0 0.0
  %125 = vmatprep.subr.mxu0 0.0
  %126 = vmatpush2.msra.mxu0 0.0
  %127 = vmatprep.subr.mxu0 0.0
  %128 = vmatpush2.msra.mxu0 0.0
  %129 = vmatprep.subr.mxu0 0.0
  %130 = vmatpush2.msra.mxu0 0.0
  %131 = vmatprep.subr.mxu0 0.0
  %132 = vmatpush2.msra.mxu0 0.0
  %133 = vmatprep.subr.mxu0 0.0
  %134 = vmatpush2.msra.mxu0 0.0
  %135 = vmatprep.subr.mxu0 0.0
  %136 = vmatpush2.msra.mxu0 0.0
  %137 = vmatprep.subr.mxu0 0.0
  %138 = vmatpush2.msra.mxu0 0.0
  %139 = vmatprep.subr.mxu0 0.0
  %140 = vmatpush2.msra.mxu0 0.0
  %141 = vmatprep.subr.mxu0 0.0
  %142 = vmatpush2.msra.mxu0 0.0
  %143 = vmatprep.mubr.f32.mxu0 0.0
  %144 = vmatmul.mubr.f32.gmra.mxu0 %v40
  %v145 = vpop.f32.mrf.mxu0
  %v146 = vadd.f32 %v77, %v145
  %v147 = vpop.f32.mrf.mxu0
  %148 = vmatprep.mubr.f32.mxu0 0.0
  %149 = vmatmul.mubr.f32.gmra.mxu0 %v41
  %v150 = vpop.f32.mrf.mxu0
  %v151 = vadd.f32 %v77, %v150
  %v152 = vpop.f32.mrf.mxu0
  %153 = vmatprep.mubr.f32.mxu0 0.0
  %154 = vmatmul.mubr.f32.gmra.mxu0 %v42
  %v155 = vpop.f32.mrf.mxu0
  %v156 = vadd.f32 %v77, %v155
  %v157 = vpop.f32.mrf.mxu0
  %158 = vmatprep.mubr.f32.mxu0 0.0
  %159 = vmatmul.mubr.f32.gmra.mxu0 %v43
  %v160 = vpop.f32.mrf.mxu0
  %v161 = vadd.f32 %v77, %v160
  %v162 = vpop.f32.mrf.mxu0
  %163 = vmatprep.mubr.f32.mxu0 0.0
  %164 = vmatmul.mubr.f32.gmra.mxu0 %v44
  %v165 = vpop.f32.mrf.mxu0
  %v166 = vadd.f32 %v77, %v165
  %v167 = vpop.f32.mrf.mxu0
  %168 = vmatprep.mubr.f32.mxu0 0.0
  %169 = vmatmul.mubr.f32.gmra.mxu0 %v45
  %v170 = vpop.f32.mrf.mxu0
  %v171 = vadd.f32 %v77, %v170
  %v172 = vpop.f32.mrf.mxu0
  %173 = vmatprep.mubr.f32.mxu0 0.0
  %174 = vmatmul.mubr.f32.gmra.mxu0 %v46
  %v175 = vpop.f32.mrf.mxu0
  %v176 = vadd.f32 %v77, %v175
  %v177 = vpop.f32.mrf.mxu0
  %178 = vmatprep.mubr.f32.mxu0 0.0
  %179 = vmatmul.mubr.f32.gmra.mxu0 %v47
  %v180 = vpop.f32.mrf.mxu0
  %v181 = vadd.f32 %v77, %v180
  %v182 = vpop.f32.mrf.mxu0
  %183 = vmatprep.mubr.f32.mxu0 0.0
  %184 = vmatmul.mubr.f32.gmra.mxu0 %v48
  %v185 = vpop.f32.mrf.mxu0
  %v186 = vadd.f32 %v77, %v185
  %v187 = vpop.f32.mrf.mxu0
  %188 = vmatprep.mubr.f32.mxu0 0.0
  %189 = vmatmul.mubr.f32.gmra.mxu0 %v49
  %v190 = vpop.f32.mrf.mxu0
  %v191 = vadd.f32 %v77, %v190
  %v192 = vpop.f32.mrf.mxu0
  %193 = vmatprep.mubr.f32.mxu0 0.0
  %194 = vmatmul.mubr.f32.gmra.mxu0 %v50
  %v195 = vpop.f32.mrf.mxu0
  %v196 = vadd.f32 %v77, %v195
  %v197 = vpop.f32.mrf.mxu0
  %198 = vmatprep.mubr.f32.mxu0 0.0
  %199 = vmatmul.mubr.f32.gmra.mxu0 %v51
  %v200 = vpop.f32.mrf.mxu0
  %v201 = vadd.f32 %v77, %v200
  %v202 = vpop.f32.mrf.mxu0
  %203 = vmatprep.mubr.f32.mxu0 0.0
  %204 = vmatmul.mubr.f32.gmra.mxu0 %v52
  %v205 = vpop.f32.mrf.mxu0
  %v206 = vadd.f32 %v77, %v205
  %v207 = vpop.f32.mrf.mxu0
  %208 = vmatprep.mubr.f32.mxu0 0.0
  %209 = vmatmul.mubr.f32.gmra.mxu0 %v53
  %v210 = vpop.f32.mrf.mxu0
  %v211 = vadd.f32 %v77, %v210
  %v212 = vpop.f32.mrf.mxu0
  %213 = vmatprep.mubr.f32.mxu0 0.0
  %214 = vmatmul.mubr.f32.gmra.mxu0 %v54
  %v215 = vpop.f32.mrf.mxu0
  %v216 = vadd.f32 %v77, %v215
  %v217 = vpop.f32.mrf.mxu0
  %218 = vmatprep.mubr.f32.mxu0 0.0
  %219 = vmatmul.mubr.f32.gmra.mxu0 %v55
  %v220 = vpop.f32.mrf.mxu0
  %v221 = vadd.f32 %v77, %v220
  %v222 = vpop.f32.mrf.mxu0
  %223 = vdwg.mxu0
  %v224 = vmul.f32 %v146, 0.5
  %v225 = vmul.f32 %v151, 0.5
  %v226 = vmul.f32 %v156, 0.5
  %v227 = vmul.f32 %v161, 0.5
  %v228 = vmul.f32 %v166, 0.5
  %v229 = vmul.f32 %v171, 0.5
  %v230 = vmul.f32 %v176, 0.5
  %v231 = vmul.f32 %v181, 0.5
  %v232 = vmul.f32 %v186, 0.5
  %v233 = vmul.f32 %v191, 0.5
  %v234 = vmul.f32 %v196, 0.5
  %v235 = vmul.f32 %v201, 0.5
  %v236 = vmul.f32 %v206, 0.5
  %v237 = vmul.f32 %v211, 0.5
  %v238 = vmul.f32 %v216, 0.5
  %v239 = vmul.f32 %v221, 0.5
  %v240 = vmul.f32 %v146, 0.70710677
  %v241 = vmul.f32 %v151, 0.70710677
  %v242 = vmul.f32 %v156, 0.70710677
  %v243 = vmul.f32 %v161, 0.70710677
  %v244 = vmul.f32 %v166, 0.70710677
  %v245 = vmul.f32 %v171, 0.70710677
  %v246 = vmul.f32 %v176, 0.70710677
  %v247 = vmul.f32 %v181, 0.70710677
  %v248 = vmul.f32 %v186, 0.70710677
  %v249 = vmul.f32 %v191, 0.70710677
  %v250 = vmul.f32 %v196, 0.70710677
  %v251 = vmul.f32 %v201, 0.70710677
  %v252 = vmul.f32 %v206, 0.70710677
  %v253 = vmul.f32 %v211, 0.70710677
  %v254 = vmul.f32 %v216, 0.70710677
  %v255 = vmul.f32 %v221, 0.70710677
  %v256 = verf.f32.pop %v240
  %v257 = verf.f32.pop %v241
  %v258 = verf.f32.pop %v242
  %v259 = verf.f32.pop %v243
  %v260 = verf.f32.pop %v244
  %v261 = verf.f32.pop %v245
  %v262 = verf.f32.pop %v246
  %v263 = verf.f32.pop %v247
  %v264 = verf.f32.pop %v248
  %v265 = verf.f32.pop %v249
  %v266 = verf.f32.pop %v250
  %v267 = verf.f32.pop %v251
  %v268 = verf.f32.pop %v252
  %v269 = verf.f32.pop %v253
  %v270 = verf.f32.pop %v254
  %v271 = verf.f32.pop %v255
  %v272 = vadd.f32 %v256, 1.0
  %v273 = vadd.f32 %v257, 1.0
  %v274 = vadd.f32 %v258, 1.0
  %v275 = vadd.f32 %v259, 1.0
  %v276 = vadd.f32 %v260, 1.0
  %v277 = vadd.f32 %v261, 1.0
  %v278 = vadd.f32 %v262, 1.0
  %v279 = vadd.f32 %v263, 1.0
  %v280 = vadd.f32 %v264, 1.0
  %v281 = vadd.f32 %v265, 1.0
  %v282 = vadd.f32 %v266, 1.0
  %v283 = vadd.f32 %v267, 1.0
  %v284 = vadd.f32 %v268, 1.0
  %v285 = vadd.f32 %v269, 1.0
  %v286 = vadd.f32 %v270, 1.0
  %v287 = vadd.f32 %v271, 1.0
  %v288 = vmul.f32 %v224, %v272
  %v289 = vmul.f32 %v225, %v273
  %v290 = vmul.f32 %v226, %v274
  %v291 = vmul.f32 %v227, %v275
  %v292 = vmul.f32 %v228, %v276
  %v293 = vmul.f32 %v229, %v277
  %v294 = vmul.f32 %v230, %v278
  %v295 = vmul.f32 %v231, %v279
  %v296 = vmul.f32 %v232, %v280
  %v297 = vmul.f32 %v233, %v281
  %v298 = vmul.f32 %v234, %v282
  %v299 = vmul.f32 %v235, %v283
  %v300 = vmul.f32 %v236, %v284
  %v301 = vmul.f32 %v237, %v285
  %v302 = vmul.f32 %v238, %v286
  %v303 = vmul.f32 %v239, %v287
  %v304 = vld [vmem:[#allocation2] sm:$0xff]
  %v305 = vld [vmem:[#allocation2 + $0x8] sm:$0xff]
  %v306 = vld [vmem:[#allocation2 + $0x10] sm:$0xff]
  %v307 = vld [vmem:[#allocation2 + $0x18] sm:$0xff]
  %v308 = vld [vmem:[#allocation2 + $0x20] sm:$0xff]
  %v309 = vld [vmem:[#allocation2 + $0x28] sm:$0xff]
  %v310 = vld [vmem:[#allocation2 + $0x30] sm:$0xff]
  %v311 = vld [vmem:[#allocation2 + $0x38] sm:$0xff]
  %v312 = vld [vmem:[#allocation2 + $0x40] sm:$0xff]
  %v313 = vld [vmem:[#allocation2 + $0x48] sm:$0xff]
  %v314 = vld [vmem:[#allocation2 + $0x50] sm:$0xff]
  %v315 = vld [vmem:[#allocation2 + $0x58] sm:$0xff]
  %v316 = vld [vmem:[#allocation2 + $0x60] sm:$0xff]
  %v317 = vld [vmem:[#allocation2 + $0x68] sm:$0xff]
  %v318 = vld [vmem:[#allocation2 + $0x70] sm:$0xff]
  %v319 = vld [vmem:[#allocation2 + $0x78] sm:$0xff]
  %v320 = vld [vmem:[%s3] sm:$0xff]
  %v321 = vld [vmem:[%s3 + $0x8] sm:$0xff]
  %v322 = vld [vmem:[%s3 + $0x10] sm:$0xff]
  %v323 = vld [vmem:[%s3 + $0x18] sm:$0xff]
  %v324 = vld [vmem:[%s3 + $0x20] sm:$0xff]
  %v325 = vld [vmem:[%s3 + $0x28] sm:$0xff]
  %v326 = vld [vmem:[%s3 + $0x30] sm:$0xff]
  %v327 = vld [vmem:[%s3 + $0x38] sm:$0xff]
  %v328 = vld [vmem:[%s3 + $0x40] sm:$0xff]
  %v329 = vld [vmem:[%s3 + $0x48] sm:$0xff]
  %v330 = vld [vmem:[%s3 + $0x50] sm:$0xff]
  %v331 = vld [vmem:[%s3 + $0x58] sm:$0xff]
  %v332 = vld [vmem:[%s3 + $0x60] sm:$0xff]
  %v333 = vld [vmem:[%s3 + $0x68] sm:$0xff]
  %v334 = vld [vmem:[%s3 + $0x70] sm:$0xff]
  %v335 = vld [vmem:[%s3 + $0x78] sm:$0xff]
  %336 = vmatprep.subr.mxu0 0.0
  %337 = vmatpush1.msra.mxu0 %v335
  %338 = vmatprep.subr.mxu0 0.0
  %339 = vmatpush1.msra.mxu0 %v334
  %340 = vmatprep.subr.mxu0 0.0
  %341 = vmatpush1.msra.mxu0 %v333
  %342 = vmatprep.subr.mxu0 0.0
  %343 = vmatpush1.msra.mxu0 %v332
  %344 = vmatprep.subr.mxu0 0.0
  %345 = vmatpush1.msra.mxu0 %v331
  %346 = vmatprep.subr.mxu0 0.0
  %347 = vmatpush1.msra.mxu0 %v330
  %348 = vmatprep.subr.mxu0 0.0
  %349 = vmatpush1.msra.mxu0 %v329
  %350 = vmatprep.subr.mxu0 0.0
  %351 = vmatpush1.msra.mxu0 %v328
  %352 = vmatprep.subr.mxu0 0.0
  %353 = vmatpush1.msra.mxu0 %v327
  %354 = vmatprep.subr.mxu0 0.0
  %355 = vmatpush1.msra.mxu0 %v326
  %356 = vmatprep.subr.mxu0 0.0
  %357 = vmatpush1.msra.mxu0 %v325
  %358 = vmatprep.subr.mxu0 0.0
  %359 = vmatpush1.msra.mxu0 %v324
  %360 = vmatprep.subr.mxu0 0.0
  %361 = vmatpush1.msra.mxu0 %v323
  %362 = vmatprep.subr.mxu0 0.0
  %363 = vmatpush1.msra.mxu0 %v322
  %364 = vmatprep.subr.mxu0 0.0
  %365 = vmatpush1.msra.mxu0 %v321
  %366 = vmatprep.subr.mxu0 0.0
  %367 = vmatpush1.msra.mxu0 %v320
  %368 = vmatprep.subr.mxu0 0.0
  %369 = vmatpush2.msra.mxu0 0.0
  %370 = vmatprep.subr.mxu0 0.0
  %371 = vmatpush2.msra.mxu0 0.0
  %372 = vmatprep.subr.mxu0 0.0
  %373 = vmatpush2.msra.mxu0 0.0
  %374 = vmatprep.subr.mxu0 0.0
  %375 = vmatpush2.msra.mxu0 0.0
  %376 = vmatprep.subr.mxu0 0.0
  %377 = vmatpush2.msra.mxu0 0.0
  %378 = vmatprep.subr.mxu0 0.0
  %379 = vmatpush2.msra.mxu0 0.0
  %380 = vmatprep.subr.mxu0 0.0
  %381 = vmatpush2.msra.mxu0 0.0
  %382 = vmatprep.subr.mxu0 0.0
  %383 = vmatpush2.msra.mxu0 0.0
  %384 = vmatprep.subr.mxu0 0.0
  %385 = vmatpush2.msra.mxu0 0.0
  %386 = vmatprep.subr.mxu0 0.0
  %387 = vmatpush2.msra.mxu0 0.0
  %388 = vmatprep.subr.mxu0 0.0
  %389 = vmatpush2.msra.mxu0 0.0
  %390 = vmatprep.subr.mxu0 0.0
  %391 = vmatpush2.msra.mxu0 0.0
  %392 = vmatprep.subr.mxu0 0.0
  %393 = vmatpush2.msra.mxu0 0.0
  %394 = vmatprep.subr.mxu0 0.0
  %395 = vmatpush2.msra.mxu0 0.0
  %396 = vmatprep.subr.mxu0 0.0
  %397 = vmatpush2.msra.mxu0 0.0
  %398 = vmatprep.subr.mxu0 0.0
  %399 = vmatpush2.msra.mxu0 0.0
  %400 = vmatprep.mubr.f32.mxu0 0.0
  %401 = vmatmul.mubr.f32.gmra.mxu0 %v288
  %v402 = vpop.f32.mrf.mxu0
  %v403 = vadd.f32 0.0, %v402
  %v404 = vpop.f32.mrf.mxu0
  %405 = vmatprep.mubr.f32.mxu0 0.0
  %406 = vmatmul.mubr.f32.gmra.mxu0 %v289
  %v407 = vpop.f32.mrf.mxu0
  %v408 = vadd.f32 0.0, %v407
  %v409 = vpop.f32.mrf.mxu0
  %410 = vmatprep.mubr.f32.mxu0 0.0
  %411 = vmatmul.mubr.f32.gmra.mxu0 %v290
  %v412 = vpop.f32.mrf.mxu0
  %v413 = vadd.f32 0.0, %v412
  %v414 = vpop.f32.mrf.mxu0
  %415 = vmatprep.mubr.f32.mxu0 0.0
  %416 = vmatmul.mubr.f32.gmra.mxu0 %v291
  %v417 = vpop.f32.mrf.mxu0
  %v418 = vadd.f32 0.0, %v417
  %v419 = vpop.f32.mrf.mxu0
  %420 = vmatprep.mubr.f32.mxu0 0.0
  %421 = vmatmul.mubr.f32.gmra.mxu0 %v292
  %v422 = vpop.f32.mrf.mxu0
  %v423 = vadd.f32 0.0, %v422
  %v424 = vpop.f32.mrf.mxu0
  %425 = vmatprep.mubr.f32.mxu0 0.0
  %426 = vmatmul.mubr.f32.gmra.mxu0 %v293
  %v427 = vpop.f32.mrf.mxu0
  %v428 = vadd.f32 0.0, %v427
  %v429 = vpop.f32.mrf.mxu0
  %430 = vmatprep.mubr.f32.mxu0 0.0
  %431 = vmatmul.mubr.f32.gmra.mxu0 %v294
  %v432 = vpop.f32.mrf.mxu0
  %v433 = vadd.f32 0.0, %v432
  %v434 = vpop.f32.mrf.mxu0
  %435 = vmatprep.mubr.f32.mxu0 0.0
  %436 = vmatmul.mubr.f32.gmra.mxu0 %v295
  %v437 = vpop.f32.mrf.mxu0
  %v438 = vadd.f32 0.0, %v437
  %v439 = vpop.f32.mrf.mxu0
  %440 = vmatprep.mubr.f32.mxu0 0.0
  %441 = vmatmul.mubr.f32.gmra.mxu0 %v296
  %v442 = vpop.f32.mrf.mxu0
  %v443 = vadd.f32 0.0, %v442
  %v444 = vpop.f32.mrf.mxu0
  %445 = vmatprep.mubr.f32.mxu0 0.0
  %446 = vmatmul.mubr.f32.gmra.mxu0 %v297
  %v447 = vpop.f32.mrf.mxu0
  %v448 = vadd.f32 0.0, %v447
  %v449 = vpop.f32.mrf.mxu0
  %450 = vmatprep.mubr.f32.mxu0 0.0
  %451 = vmatmul.mubr.f32.gmra.mxu0 %v298
  %v452 = vpop.f32.mrf.mxu0
  %v453 = vadd.f32 0.0, %v452
  %v454 = vpop.f32.mrf.mxu0
  %455 = vmatprep.mubr.f32.mxu0 0.0
  %456 = vmatmul.mubr.f32.gmra.mxu0 %v299
  %v457 = vpop.f32.mrf.mxu0
  %v458 = vadd.f32 0.0, %v457
  %v459 = vpop.f32.mrf.mxu0
  %460 = vmatprep.mubr.f32.mxu0 0.0
  %461 = vmatmul.mubr.f32.gmra.mxu0 %v300
  %v462 = vpop.f32.mrf.mxu0
  %v463 = vadd.f32 0.0, %v462
  %v464 = vpop.f32.mrf.mxu0
  %465 = vmatprep.mubr.f32.mxu0 0.0
  %466 = vmatmul.mubr.f32.gmra.mxu0 %v301
  %v467 = vpop.f32.mrf.mxu0
  %v468 = vadd.f32 0.0, %v467
  %v469 = vpop.f32.mrf.mxu0
  %470 = vmatprep.mubr.f32.mxu0 0.0
  %471 = vmatmul.mubr.f32.gmra.mxu0 %v302
  %v472 = vpop.f32.mrf.mxu0
  %v473 = vadd.f32 0.0, %v472
  %v474 = vpop.f32.mrf.mxu0
  %475 = vmatprep.mubr.f32.mxu0 0.0
  %476 = vmatmul.mubr.f32.gmra.mxu0 %v303
  %v477 = vpop.f32.mrf.mxu0
  %v478 = vadd.f32 0.0, %v477
  %v479 = vpop.f32.mrf.mxu0
  %480 = vdwg.mxu0
  %v481 = vadd.f32 %v304, %v403
  %v482 = vadd.f32 %v305, %v408
  %v483 = vadd.f32 %v306, %v413
  %v484 = vadd.f32 %v307, %v418
  %v485 = vadd.f32 %v308, %v423
  %v486 = vadd.f32 %v309, %v428
  %v487 = vadd.f32 %v310, %v433
  %v488 = vadd.f32 %v311, %v438
  %v489 = vadd.f32 %v312, %v443
  %v490 = vadd.f32 %v313, %v448
  %v491 = vadd.f32 %v314, %v453
  %v492 = vadd.f32 %v315, %v458
  %v493 = vadd.f32 %v316, %v463
  %v494 = vadd.f32 %v317, %v468
  %v495 = vadd.f32 %v318, %v473
  %v496 = vadd.f32 %v319, %v478
  %497 = vst [vmem:[#allocation2] sm:$0xff] %v481
  %498 = vst [vmem:[#allocation2 + $0x8] sm:$0xff] %v482
  %499 = vst [vmem:[#allocation2 + $0x10] sm:$0xff] %v483
  %500 = vst [vmem:[#allocation2 + $0x18] sm:$0xff] %v484
  %501 = vst [vmem:[#allocation2 + $0x20] sm:$0xff] %v485
  %502 = vst [vmem:[#allocation2 + $0x28] sm:$0xff] %v486
  %503 = vst [vmem:[#allocation2 + $0x30] sm:$0xff] %v487
  %504 = vst [vmem:[#allocation2 + $0x38] sm:$0xff] %v488
  %505 = vst [vmem:[#allocation2 + $0x40] sm:$0xff] %v489
  %506 = vst [vmem:[#allocation2 + $0x48] sm:$0xff] %v490
  %507 = vst [vmem:[#allocation2 + $0x50] sm:$0xff] %v491
  %508 = vst [vmem:[#allocation2 + $0x58] sm:$0xff] %v492
  %509 = vst [vmem:[#allocation2 + $0x60] sm:$0xff] %v493
  %510 = vst [vmem:[#allocation2 + $0x68] sm:$0xff] %v494
  %511 = vst [vmem:[#allocation2 + $0x70] sm:$0xff] %v495
  %512 = vst [vmem:[#allocation2 + $0x78] sm:$0xff] %v496
  // Predicated region
  $region26: #{a_call__.1} parent=0 // pred_check
    %p513 = pneg %p20
  $region27: #{a_call__.1} parent=0 // pred_check_branch
    %515 = sbr.rel (%p513) target = $region29
  $region28: #{a_call__.1} parent=0 // pred_region
    %v516 = vld [vmem:[#allocation2] sm:$0xff]
    %v517 = vld [vmem:[#allocation2 + $0x8] sm:$0xff]
    %v518 = vld [vmem:[#allocation2 + $0x10] sm:$0xff]
    %v519 = vld [vmem:[#allocation2 + $0x18] sm:$0xff]
    %v520 = vld [vmem:[#allocation2 + $0x20] sm:$0xff]
    %v521 = vld [vmem:[#allocation2 + $0x28] sm:$0xff]
    %v522 = vld [vmem:[#allocation2 + $0x30] sm:$0xff]
    %v523 = vld [vmem:[#allocation2 + $0x38] sm:$0xff]
    %v524 = vld [vmem:[#allocation2 + $0x40] sm:$0xff]
    %v525 = vld [vmem:[#allocation2 + $0x48] sm:$0xff]
    %v526 = vld [vmem:[#allocation2 + $0x50] sm:$0xff]
    %v527 = vld [vmem:[#allocation2 + $0x58] sm:$0xff]
    %v528 = vld [vmem:[#allocation2 + $0x60] sm:$0xff]
    %v529 = vld [vmem:[#allocation2 + $0x68] sm:$0xff]
    %v530 = vld [vmem:[#allocation2 + $0x70] sm:$0xff]
    %v531 = vld [vmem:[#allocation2 + $0x78] sm:$0xff]
    %v532 = vld [vmem:[%s4] sm:$0x1]
    %v534 = vlaneseq
    %v535 = vshrl.u32 %v534, 7
    %v536 = vsub.s32 0, %v535
    %v537 = vrot.slane %v532, %v536
    %v539 = vadd.f32 %v516, %v537
    %v540 = vadd.f32 %v517, %v537
    %v541 = vadd.f32 %v518, %v537
    %v542 = vadd.f32 %v519, %v537
    %v543 = vadd.f32 %v520, %v537
    %v544 = vadd.f32 %v521, %v537
    %v545 = vadd.f32 %v522, %v537
    %v546 = vadd.f32 %v523, %v537
    %v547 = vadd.f32 %v524, %v537
    %v548 = vadd.f32 %v525, %v537
    %v549 = vadd.f32 %v526, %v537
    %v550 = vadd.f32 %v527, %v537
    %v551 = vadd.f32 %v528, %v537
    %v552 = vadd.f32 %v529, %v537
    %v553 = vadd.f32 %v530, %v537
    %v554 = vadd.f32 %v531, %v537
    %555 = vst [vmem:[%s5] sm:$0xff] %v539
    %556 = vst [vmem:[%s5 + $0x8] sm:$0xff] %v540
    %557 = vst [vmem:[%s5 + $0x10] sm:$0xff] %v541
    %558 = vst [vmem:[%s5 + $0x18] sm:$0xff] %v542
    %559 = vst [vmem:[%s5 + $0x20] sm:$0xff] %v543
    %560 = vst [vmem:[%s5 + $0x28] sm:$0xff] %v544
    %561 = vst [vmem:[%s5 + $0x30] sm:$0xff] %v545
    %562 = vst [vmem:[%s5 + $0x38] sm:$0xff] %v546
    %563 = vst [vmem:[%s5 + $0x40] sm:$0xff] %v547
    %564 = vst [vmem:[%s5 + $0x48] sm:$0xff] %v548
    %565 = vst [vmem:[%s5 + $0x50] sm:$0xff] %v549
    %566 = vst [vmem:[%s5 + $0x58] sm:$0xff] %v550
    %567 = vst [vmem:[%s5 + $0x60] sm:$0xff] %v551
    %568 = vst [vmem:[%s5 + $0x68] sm:$0xff] %v552
    %569 = vst [vmem:[%s5 + $0x70] sm:$0xff] %v553
    %570 = vst [vmem:[%s5 + $0x78] sm:$0xff] %v554
  $region29: #{a_call__.1} parent=0 // pred_fallthru
    _
  // Predicated region
  $region30: #{a_call__.1} parent=0 // pred_check
    _
  $region31: #{a_call__.1} parent=0 // pred_check_branch
    %572 = sbr.rel (0) target = $region33
  $region32: #{a_call__.1} parent=0 // pred_region
    _
  $region33: #{a_call__.1} parent=0 // pred_fallthru
    _
  // Predicated region
  $region34: #{a_call__.1} parent=0 // pred_check
    _
  $region35: #{a_call__.1} parent=0 // pred_check_branch
    %574 = sbr.rel (0) target = $region37
  $region36: #{a_call__.1} parent=0 // pred_region
    _
  $region37: #{a_call__.1} parent=0 // pred_fallthru
    _

</llo_original>
